<compile_context>
chip_gen: v7x
topology: tpu7x:2x2x1
jax: 0.10.0
libtpu: 0.0.40
codegen_flags: <defaults>
</compile_context>

<pallas_src>
import functools
import math

import jax
import jax.numpy as jnp
from jax.experimental import pallas as pl
from jax.experimental.pallas import tpu as pltpu


def _dice_partials_kernel(x_ref, t_ref, o_ref, acc_ref, *,
                          s_total, num_inner, mask_from):
    """Accumulates per-channel [intersect, denominator] partials for one output slab.

    x_ref, t_ref : (1, C, ts) blocks (channels on sublanes, spatial on lanes)
    o_ref        : (1, 1, C, 2) output block for this (batch, spatial-outer) slab
    acc_ref      : (C, 2) VMEM scratch accumulator
    mask_from    : static; spatial-tile index from which masking is required
                   (None => no tile ever needs masking).
    """
    _, c, ts = x_ref.shape
    si = pl.program_id(2)
    s_global = pl.program_id(1) * num_inner + si   # global spatial-tile index

    @pl.when(si == 0)
    def _init():
        acc_ref[...] = jnp.zeros_like(acc_ref)

    x = x_ref[0].astype(jnp.float32)          # (C, ts)  in-kernel cast
    t = t_ref[0].astype(jnp.float32)          # (C, ts)

    # Channel softmax along the sublane axis (numerically stable). Columns are
    # independent, so garbage in padded columns cannot leak into valid ones.
    m = jnp.max(x, axis=0, keepdims=True)                         # (1, ts)
    e = jnp.exp(x - m)                                            # (C, ts)
    inv = pl.reciprocal(jnp.sum(e, axis=0, keepdims=True), approx=True)
    p = e * inv                                                   # softmax probs

    def _accumulate(pp, tt):
        inter = jnp.sum(pp * tt, axis=1, keepdims=True)   # (C, 1) intersect
        denom = jnp.sum(pp + tt, axis=1, keepdims=True)   # (C, 1) sum(p)+sum(t)
        acc_ref[...] += jnp.concatenate([inter, denom], axis=1)   # (C, 2)

    if mask_from is None:
        # Static fast path: spatial extent tiles evenly and no duplicate tiles.
        _accumulate(p, t)
    else:
        @pl.when(s_global < mask_from)
        def _regular():                         # interior tiles: no mask cost
            _accumulate(p, t)

        @pl.when(s_global >= mask_from)
        def _tail():                            # last / duplicate tile only
            lane = jax.lax.broadcasted_iota(jnp.int32, (1, ts), 1) + s_global * ts
            valid = lane < s_total              # (1, ts) row, broadcast in where
            _accumulate(jnp.where(valid, p, 0.0), jnp.where(valid, t, 0.0))

    @pl.when(si == num_inner - 1)
    def _finalize():
        o_ref[0, 0] = acc_ref[...]              # single output write per slab


def _round_up(v, m):
    return ((v + m - 1) // m) * m


def soft_dice_loss(output, target, *, ignore_index=None, smooth=1e-5,
                   max_block_bytes=None):
    """JAX/Pallas equivalent of SoftDiceLoss.forward(output, target).

    output, target: (N, C, *spatial) arrays (NCHW-style, like PyTorch).
    Returns a scalar float32 loss.
    """
    assert output.shape == target.shape, (output.shape, target.shape)
    n, c = output.shape[0], output.shape[1]
    s_total = int(math.prod(output.shape[2:]))

    # Free reshapes (no transpose, no pad, no host-side cast).
    x = output.reshape(n, c, s_total)
    t = target.reshape(n, c, s_total)

    # ---- chip-aware tile-size / VMEM budgeting ------------------------------
    try:
        vmem_cap = int(getattr(pltpu.get_tpu_info(), "vmem_capacity_bytes",
                               64 << 20))
    except Exception:  # pragma: no cover - conservative fallback
        vmem_cap = 64 << 20
    if vmem_cap <= (64 << 20):
        # v7x-class: 64 MiB VMEM, 3.2 TB/s HBM -> compute-bound; smaller tiles.
        default_block_bytes, vmem_budget = 2 << 20, 44 << 20
    else:
        # v5e/v6e: 128 MiB VMEM, HBM-bound -> larger tiles amortize step cost.
        default_block_bytes, vmem_budget = 8 << 20, 100 << 20
    if max_block_bytes is None:
        max_block_bytes = default_block_bytes

    x_item = x.dtype.itemsize
    t_item = t.dtype.itemsize
    # Sublane tile: 8 for 32-bit, 16 for 16-bit, 32 for 8-bit dtypes.
    c_pad_x = _round_up(c, max(8, 32 // x_item))
    c_pad_t = _round_up(c, max(8, 32 // t_item))
    c_pad_f32 = _round_up(c, 8)

    # Spatial tile: dtype-aware, counted against the *sublane-padded* block,
    # lane-aligned (x128), or the full extent when it fits in one tile.
    ts = max_block_bytes // (c_pad_x * x_item)
    ts = max(128, (ts // 128) * 128)
    if ts >= s_total:
        ts = s_total
    num_s = pl.cdiv(s_total, ts)

    # Dual-TC utilisation when the batch axis alone cannot feed both cores:
    # split spatial tiles over an extra "parallel" outer axis.
    s_outer = 2 if (n == 1 and num_s >= 2) else 1
    num_inner = pl.cdiv(num_s, s_outer)
    overflow = s_outer * num_inner > num_s          # duplicate last tile exists
    has_tail = (s_total % ts) != 0

    if has_tail:
        mask_from = num_s - 1          # last real tile is partial (+ duplicates)
    elif overflow:
        mask_from = num_s              # only duplicate tiles need zeroing
    else:
        mask_from = None               # static: no masking code emitted

    if overflow:
        def spatial_map(i, so, si):    # clamp duplicate tile to a valid block
            return (i, 0, jnp.minimum(so * num_inner + si, num_s - 1))
    else:
        def spatial_map(i, so, si):
            return (i, 0, so * num_inner + si)

    # VMEM footprint: double-buffered sublane-padded input blocks plus ~4
    # full-block f32 temporaries (x/t casts, e, p, products) plus margin for
    # the tiny output block / scratch / semaphores.
    input_bufs = 2 * ts * (c_pad_x * x_item + c_pad_t * t_item)
    temporaries = 4 * c_pad_f32 * ts * 4
    vmem_bytes = int(min(max(input_bufs + temporaries + (2 << 20), 8 << 20),
                         vmem_budget))

    partials = pl.pallas_call(
        functools.partial(_dice_partials_kernel, s_total=s_total,
                          num_inner=num_inner, mask_from=mask_from),
        out_shape=jax.ShapeDtypeStruct((n, s_outer, c, 2), jnp.float32),
        grid=(n, s_outer, num_inner),
        in_specs=[
            pl.BlockSpec((1, c, ts), spatial_map),
            pl.BlockSpec((1, c, ts), spatial_map),
        ],
        out_specs=pl.BlockSpec((1, 1, c, 2), lambda i, so, si: (i, so, 0, 0)),
        scratch_shapes=[pltpu.VMEM((c, 2), jnp.float32)],
        compiler_params=pltpu.CompilerParams(
            dimension_semantics=("parallel", "parallel", "arbitrary"),
            vmem_limit_bytes=vmem_bytes),
    )(x, t)

    per_channel = jnp.sum(partials, axis=(0, 1))   # (C, 2) over batch & spatial slabs
    intersect = per_channel[:, 0]
    denominator = per_channel[:, 1]

    if ignore_index is not None:
        keep = jnp.arange(c) != ignore_index
        intersect = jnp.where(keep, intersect, 0.0)
        denominator = jnp.where(keep, denominator, 0.0)

    dice = 2.0 * jnp.sum(intersect) / jnp.maximum(jnp.sum(denominator), smooth)
    return (1.0 - dice).astype(jnp.float32)


def _reference_soft_dice(output, target, ignore_index=None, smooth=1e-5):
    c = output.shape[1]
    p = jax.nn.softmax(output.astype(jnp.float32), axis=1)
    p = jnp.moveaxis(p, 1, 0).reshape(c, -1)
    t = jnp.moveaxis(target, 1, 0).reshape(c, -1).astype(jnp.float32)
    intersect = jnp.sum(p * t, axis=-1)
    denom = jnp.sum(p, axis=-1) + jnp.sum(t, axis=-1)
    if ignore_index is not None:
        keep = jnp.arange(c) != ignore_index
        intersect = jnp.where(keep, intersect, 0.0)
        denom = jnp.where(keep, denom, 0.0)
    dice = 2.0 * jnp.sum(intersect) / jnp.maximum(jnp.sum(denom), smooth)
    return 1.0 - dice


if __name__ == "__main__":
    key = jax.random.PRNGKey(0)
    k1, k2, k3, k4, k5, k6 = jax.random.split(key, 6)

    # Tolerance covers the approximate EUP reciprocal in the softmax denom.
    ATOL = RTOL = 2e-3

    # Test 1: lane-aligned spatial extent, single spatial tile per batch entry.
    N, C, H, W = 2, 4, 16, 16
    logits = jax.random.normal(k1, (N, C, H, W), dtype=jnp.float32)
    labels = jax.random.randint(k2, (N, H, W), 0, C)
    target = jnp.moveaxis(jax.nn.one_hot(labels, C, dtype=jnp.float32), -1, 1)

    loss = jax.block_until_ready(soft_dice_loss(logits, target))
    ref = _reference_soft_dice(logits, target)
    assert jnp.allclose(loss, ref, atol=ATOL, rtol=RTOL), (loss, ref)

    # Test 2: odd spatial extent + tiny block size to force multiple spatial
    # tiles (exercises the gated tail mask, scratch accumulation across the
    # "arbitrary" axis, and ignore_index).
    N2, C2, H2, W2 = 2, 4, 17, 17
    logits2 = jax.random.normal(k3, (N2, C2, H2, W2), dtype=jnp.float32)
    labels2 = jax.random.randint(k4, (N2, H2, W2), 0, C2)
    target2 = jnp.moveaxis(jax.nn.one_hot(labels2, C2, dtype=jnp.float32), -1, 1)

    loss2 = jax.block_until_ready(
        soft_dice_loss(logits2, target2, ignore_index=1, max_block_bytes=4096))
    ref2 = _reference_soft_dice(logits2, target2, ignore_index=1)
    assert jnp.allclose(loss2, ref2, atol=ATOL, rtol=RTOL), (loss2, ref2)

    # Test 3: N=1 with bf16 logits -> exercises the dual-TC spatial-outer split
    # (including the clamped duplicate tile for an odd tile count), the
    # dtype-aware tile formula, and the in-kernel cast.
    N3, C3, H3, W3 = 1, 4, 17, 17
    logits3 = jax.random.normal(k5, (N3, C3, H3, W3), dtype=jnp.float32
                                ).astype(jnp.bfloat16)
    labels3 = jax.random.randint(k6, (N3, H3, W3), 0, C3)
    target3 = jnp.moveaxis(jax.nn.one_hot(labels3, C3, dtype=jnp.float32), -1, 1)

    loss3 = jax.block_until_ready(
        soft_dice_loss(logits3, target3, max_block_bytes=2048))
    ref3 = _reference_soft_dice(logits3, target3)
    assert jnp.allclose(loss3, ref3, atol=ATOL, rtol=RTOL), (loss3, ref3)

    print("KERNEL_OK")
</pallas_src>

<mosaic_0001>
module attributes {stable_mosaic.version = 11 : i64} {
  func.func @_dice_partials_kernel(%arg0: i32, %arg1: i32, %arg2: i32, %arg3: memref<1x4x256xf32, #tpu.memory_space<vmem>>, %arg4: memref<1x4x256xf32, #tpu.memory_space<vmem>>, %arg5: memref<1x1x4x2xf32, #tpu.memory_space<vmem>>, %arg6: memref<4x2xf32, #tpu.memory_space<vmem>>) attributes {dimension_semantics = [#tpu.dimension_semantics<parallel>, #tpu.dimension_semantics<parallel>, #tpu.dimension_semantics<arbitrary>], iteration_bounds = array<i64: 2, 1, 1>, scalar_prefetch = 0 : i64, scratch_operands = 1 : i64, tpu.core_type = #tpu.core_type<tc>, window_params = [{transform_indices = @transform_0, window_bounds = array<i64: 1, 4, 256>}, {transform_indices = @transform_1, window_bounds = array<i64: 1, 4, 256>}, {transform_indices = @transform_2, window_bounds = array<i64: 1, 1, 4, 2>}]} {
    %c0_i32 = arith.constant 0 : i32
    %0 = arith.cmpi eq, %arg2, %c0_i32 : i32
    %1 = arith.extui %0 : i1 to i32
    %c0_i32_0 = arith.constant 0 : i32
    %2 = arith.cmpi ne, %1, %c0_i32_0 : i32
    scf.if %2 {
      %cst_15 = arith.constant 0.000000e+00 : f32
      %30 = vector.broadcast %cst_15 : f32 to vector<4x2xf32>
      %c0_16 = arith.constant 0 : index
      %c0_17 = arith.constant 0 : index
      %31 = vector.load %arg6[%c0_16, %c0_17] : memref<4x2xf32, #tpu.memory_space<vmem>>, vector<4x2xf32>
      tpu.vector_store %arg6[%c0_16, %c0_17], %30 {strides = array<i32>} : memref<4x2xf32, #tpu.memory_space<vmem>>, vector<4x2xf32>,
    } else {
    }
    %c0 = arith.constant 0 : index
    %c0_1 = arith.constant 0 : index
    %c0_2 = arith.constant 0 : index
    %3 = vector.load %arg3[%c0, %c0_1, %c0_2] : memref<1x4x256xf32, #tpu.memory_space<vmem>>, vector<1x4x256xf32>
    %4 = vector.shape_cast %3 : vector<1x4x256xf32> to vector<4x256xf32>
    %c0_3 = arith.constant 0 : index
    %c0_4 = arith.constant 0 : index
    %c0_5 = arith.constant 0 : index
    %5 = vector.load %arg4[%c0_3, %c0_4, %c0_5] : memref<1x4x256xf32, #tpu.memory_space<vmem>>, vector<1x4x256xf32>
    %6 = vector.shape_cast %5 : vector<1x4x256xf32> to vector<4x256xf32>
    %cst = arith.constant dense<0xFF800000> : vector<256xf32>
    %7 = vector.multi_reduction <maximumf>, %4, %cst [0] : vector<4x256xf32> to vector<256xf32>
    %8 = vector.shape_cast %7 : vector<256xf32> to vector<1x256xf32>
    %9 = vector.broadcast %8 : vector<1x256xf32> to vector<4x256xf32>
    %10 = arith.subf %4, %9 : vector<4x256xf32>
    %11 = math.exp %10 : vector<4x256xf32>
    %cst_6 = arith.constant dense<0.000000e+00> : vector<256xf32>
    %12 = vector.multi_reduction <add>, %11, %cst_6 [0] : vector<4x256xf32> to vector<256xf32>
    %13 = vector.shape_cast %12 : vector<256xf32> to vector<1x256xf32>
    %14 = tpu.reciprocal %13 {approx = true} : vector<1x256xf32> -> vector<1x256xf32>
    %15 = vector.broadcast %14 : vector<1x256xf32> to vector<4x256xf32>
    %16 = arith.mulf %11, %15 : vector<4x256xf32>
    %17 = arith.mulf %16, %6 : vector<4x256xf32>
    %cst_7 = arith.constant dense<0.000000e+00> : vector<4xf32>
    %18 = vector.multi_reduction <add>, %17, %cst_7 [1] : vector<4x256xf32> to vector<4xf32>
    %19 = vector.shape_cast %18 : vector<4xf32> to vector<4x1xf32>
    %20 = arith.addf %16, %6 : vector<4x256xf32>
    %cst_8 = arith.constant dense<0.000000e+00> : vector<4xf32>
    %21 = vector.multi_reduction <add>, %20, %cst_8 [1] : vector<4x256xf32> to vector<4xf32>
    %22 = vector.shape_cast %21 : vector<4xf32> to vector<4x1xf32>
    %c0_9 = arith.constant 0 : index
    %c0_10 = arith.constant 0 : index
    %23 = vector.load %arg6[%c0_9, %c0_10] : memref<4x2xf32, #tpu.memory_space<vmem>>, vector<4x2xf32>
    %24 = tpu.concatenate %19, %22 in 1 : vector<4x1xf32>, vector<4x1xf32> -> vector<4x2xf32>
    %25 = arith.addf %23, %24 : vector<4x2xf32>
    %c0_11 = arith.constant 0 : index
    %c0_12 = arith.constant 0 : index
    %26 = vector.load %arg6[%c0_11, %c0_12] : memref<4x2xf32, #tpu.memory_space<vmem>>, vector<4x2xf32>
    tpu.vector_store %arg6[%c0_11, %c0_12], %25 {strides = array<i32>} : memref<4x2xf32, #tpu.memory_space<vmem>>, vector<4x2xf32>,
    %c0_i32_13 = arith.constant 0 : i32
    %27 = arith.cmpi eq, %arg2, %c0_i32_13 : i32
    %28 = arith.extui %27 : i1 to i32
    %c0_i32_14 = arith.constant 0 : i32
    %29 = arith.cmpi ne, %28, %c0_i32_14 : i32
    scf.if %29 {
      %c0_15 = arith.constant 0 : index
      %c0_16 = arith.constant 0 : index
      %30 = vector.load %arg6[%c0_15, %c0_16] : memref<4x2xf32, #tpu.memory_space<vmem>>, vector<4x2xf32>
      %c0_17 = arith.constant 0 : index
      %c0_18 = arith.constant 0 : index
      %c0_19 = arith.constant 0 : index
      %c0_20 = arith.constant 0 : index
      %31 = vector.load %arg5[%c0_17, %c0_18, %c0_19, %c0_20] : memref<1x1x4x2xf32, #tpu.memory_space<vmem>>, vector<1x1x4x2xf32>
      %32 = vector.shape_cast %31 : vector<1x1x4x2xf32> to vector<4x2xf32>
      %33 = vector.shape_cast %30 : vector<4x2xf32> to vector<1x1x4x2xf32>
      tpu.vector_store %arg5[%c0_17, %c0_18, %c0_19, %c0_20], %33 {strides = array<i32>} : memref<1x1x4x2xf32, #tpu.memory_space<vmem>>, vector<1x1x4x2xf32>,
    } else {
    }
    return
  }
  func.func @transform_0(%arg0: i32, %arg1: i32, %arg2: i32) -> (i32, i32, i32) {
    %c1_i32 = arith.constant 1 : i32
    %0 = arith.muli %arg1, %c1_i32 : i32
    %1 = arith.addi %0, %arg2 : i32
    %c0_i32 = arith.constant 0 : i32
    %c0_i32_0 = arith.constant 0 : i32
    return %arg0, %c0_i32, %1 : i32, i32, i32
  }
  func.func @transform_1(%arg0: i32, %arg1: i32, %arg2: i32) -> (i32, i32, i32) {
    %c1_i32 = arith.constant 1 : i32
    %0 = arith.muli %arg1, %c1_i32 : i32
    %1 = arith.addi %0, %arg2 : i32
    %c0_i32 = arith.constant 0 : i32
    %c0_i32_0 = arith.constant 0 : i32
    return %arg0, %c0_i32, %1 : i32, i32, i32
  }
  func.func @transform_2(%arg0: i32, %arg1: i32, %arg2: i32) -> (i32, i32, i32, i32) {
    %c0_i32 = arith.constant 0 : i32
    %c0_i32_0 = arith.constant 0 : i32
    %c0_i32_1 = arith.constant 0 : i32
    return %arg0, %arg1, %c0_i32, %c0_i32_0 : i32, i32, i32, i32
  }
}

</mosaic_0001>

<llo_original>
// kernel: tpu_custom_call.1
$region0: #{tpu_custom_call.1}
  #allocation0 [shape = 'u32[]', space=smem, size = 0x4, offset = 0x4, fixed_abs, tag = 'smem constant byte address 0x4 - core index']
  #allocation1 [shape = 'u32[144,128]{1,0:T(1,128)}', space=vmem, size = 0x12000, scoped, tag = 'internal scratch']
  #allocation2 [shape = 'f32[4,2]{1,0:T(4,128)}', space=vmem, size = 0x800, scoped, tag = 'scratch operand']
  %s0 = inlined_call_operand.hbm [shape: f32[2,4,256], index: 0, kind: input, shape index: {}]
  %s1 = inlined_call_operand.hbm [shape: f32[2,4,256], index: 1, kind: input, shape index: {}]
  %s2 = inlined_call_operand.vmem [shape: f32[2,1,4,2], index: 2, kind: output, shape index: {}]
  %s3 = sld [smem:[#allocation0]]
  $region57: #{tpu_custom_call.1} parent=0
    _
  %s5 = ssub.s32 1, %s3
  %s6 = scalar_select 0, %s5, %s3
  $region1: #{tpu_custom_call.1} parent=0
    #allocation3 [shape = 'u8[8192]{0}', space=vmem, size = 0x2000, scoped, tag = 'input window, operand 0']
    #allocation4 [shape = 's32[2]{0}', space=sflag, size = 0x8, scoped, tag = 'scoped memory for tpu_custom_call.1']
    #allocation5 [shape = 'u8[8192]{0}', space=vmem, size = 0x2000, scoped, tag = 'input window, operand 1']
    #allocation6 [shape = 's32[2]{0}', space=sflag, size = 0x8, scoped, tag = 'scoped memory for tpu_custom_call.1']
    %7 = vsyncpa [#allocation4], 0
    %s8 = scalar_lea.sflag [#allocation4], 1
    %9 = vsyncpa %s8, 0
    %10 = vsyncpa [#allocation6], 0
    %s11 = scalar_lea.sflag [#allocation6], 1
    %12 = vsyncpa %s11, 0
    loop: start=0, step=1, limit=4
    $region2: #{tpu_custom_call.1} parent=1 // loop_pre_header
      _
    $region3: #{tpu_custom_call.1} parent=1 // loop_header
      %s14 = sphi 0, %s18
      %p15 = scmp.ge.s32.totalorder %s14, 4
      %s21 = sphi 0, %s40
      %s22 = sphi 0, %s36
      %s23 = sphi 0, %s32
      %s24 = sphi 0, %s21
      %s25 = sphi 0, %s22
      %s26 = sphi 0, %s23
      %s27 = sphi 0, %s24
      %s28 = sphi 0, %s25
      %s29 = sphi 0, %s26
      %s47 = sphi 0, %s49
      %s50 = sphi 0, %s47
      %s51 = sphi 0, %s50
      %s67 = sphi 0, %s51
      %s77 = sphi 0, %s79
      %s80 = sphi 0, %s77
      %s81 = sphi 0, %s80
      %s97 = sphi 0, %s81
      %s105 = sphi 0, %s107
      %s108 = sphi 0, %s105
      %s109 = sphi 0, %s108
      %s125 = sphi 0, %s109
    $region4: #{tpu_custom_call.1} parent=1 // loop_header_branch
      %17 = sbr.rel (%p15) target = $region8
    $region5: #{tpu_custom_call.1} parent=1 // loop_body
      %s19 = ssub.s32 %s14, 1
      %s20 = ssub.s32 %s14, 2
      %s30 = sadd.s32 1, %s23
      %p31 = scmp.ge.s32.totalorder %s30, 1
      %s32 = scalar_select %p31, 0, %s30
      %s33 = sadd.s32 1, %s22
      %s34 = scalar_select %p31, %s33, %s22
      %p35 = scmp.ge.s32.totalorder %s34, 1
      %s36 = scalar_select %p35, 0, %s34
      %s37 = sadd.s32 1, %s21
      %s38 = scalar_select %p35, %s37, %s21
      %p39 = scmp.ge.s32.totalorder %s38, 2
      %s40 = scalar_select %p39, 0, %s38
      %s41 = sadd.s32 %s22, %s23
      %s42 = sadd.s32 %s36, %s32
      %s43 = ssub.s32 %s21, %s40
      %s44 = ssub.s32 %s41, %s42
      %s45 = sor.u32 %s43, %s44
      %p46 = scmp.eq.s32.totalorder %s45, 0
      %s48 = sadd.s32 %s47, 1
      %s49 = scalar_select %p46, %s47, %s48
      %p52 = pneg %p46
      %p53 = scmp.eq.s32.totalorder %s14, 1
      %p54 = por %p52, %p53
      %p55 = scmp.ne.s32.totalorder %s47, %s50
      %p56 = scmp.eq.s32.totalorder %s14, 0
      %p57 = por %p55, %p56
      %p58 = scmp.ne.s32.totalorder %s47, %s50
      %p59 = scmp.eq.s32.totalorder %s19, 1
      %p60 = por %p58, %p59
      %p61 = scmp.ne.s32.totalorder %s50, %s51
      %p62 = scmp.eq.s32.totalorder %s19, 0
      %p63 = por %p61, %p62
      %p64 = scmp.ne.s32.totalorder %s50, %s51
      %p65 = scmp.eq.s32.totalorder %s20, 1
      %p66 = por %p64, %p65
      %p68 = scmp.ne.s32.totalorder %s51, %s67
      %p69 = scmp.eq.s32.totalorder %s20, 0
      %p70 = por %p68, %p69
      %s71 = sadd.s32 %s22, %s23
      %s72 = sadd.s32 %s36, %s32
      %s73 = ssub.s32 %s21, %s40
      %s74 = ssub.s32 %s71, %s72
      %s75 = sor.u32 %s73, %s74
      %p76 = scmp.eq.s32.totalorder %s75, 0
      %s78 = sadd.s32 %s77, 1
      %s79 = scalar_select %p76, %s77, %s78
      %p82 = pneg %p76
      %p83 = scmp.eq.s32.totalorder %s14, 1
      %p84 = por %p82, %p83
      %p85 = scmp.ne.s32.totalorder %s77, %s80
      %p86 = scmp.eq.s32.totalorder %s14, 0
      %p87 = por %p85, %p86
      %p88 = scmp.ne.s32.totalorder %s77, %s80
      %p89 = scmp.eq.s32.totalorder %s19, 1
      %p90 = por %p88, %p89
      %p91 = scmp.ne.s32.totalorder %s80, %s81
      %p92 = scmp.eq.s32.totalorder %s19, 0
      %p93 = por %p91, %p92
      %p94 = scmp.ne.s32.totalorder %s80, %s81
      %p95 = scmp.eq.s32.totalorder %s20, 1
      %p96 = por %p94, %p95
      %p98 = scmp.ne.s32.totalorder %s81, %s97
      %p99 = scmp.eq.s32.totalorder %s20, 0
      %p100 = por %p98, %p99
      %s101 = ssub.s32 %s21, %s40
      %s102 = ssub.s32 %s22, %s36
      %s103 = sor.u32 %s101, %s102
      %p104 = scmp.eq.s32.totalorder %s103, 0
      %s106 = sadd.s32 %s105, 1
      %s107 = scalar_select %p104, %s105, %s106
      %p110 = pneg %p104
      %p111 = scmp.eq.s32.totalorder %s14, 1
      %p112 = por %p110, %p111
      %p113 = scmp.ne.s32.totalorder %s105, %s108
      %p114 = scmp.eq.s32.totalorder %s14, 0
      %p115 = por %p113, %p114
      %p116 = scmp.ne.s32.totalorder %s105, %s108
      %p117 = scmp.eq.s32.totalorder %s19, 1
      %p118 = por %p116, %p117
      %p119 = scmp.ne.s32.totalorder %s108, %s109
      %p120 = scmp.eq.s32.totalorder %s19, 0
      %p121 = por %p119, %p120
      %p122 = scmp.ne.s32.totalorder %s108, %s109
      %p123 = scmp.eq.s32.totalorder %s20, 1
      %p124 = por %p122, %p123
      %p126 = scmp.ne.s32.totalorder %s109, %s125
      %p127 = scmp.eq.s32.totalorder %s20, 0
      %p128 = por %p126, %p127
      %p129 = scmp.le.s32.totalorder 1, %s14
      %p130 = scmp.lt.s32.totalorder %s14, 3
      %p131 = pnand %p129, %p130
      %p132 = pneg %p131
      // Predicated region
      $region9: #{tpu_custom_call.1} parent=5 // pred_check
        _
      $region10: #{tpu_custom_call.1} parent=5 // pred_check_branch
        %134 = sbr.rel (%p131) target = $region12
      $region11: #{tpu_custom_call.1} parent=5 // pred_region
        %s135 = ssub.s32 %s14, 1
      $region12: #{tpu_custom_call.1} parent=5 // pred_fallthru
        _
      %p136 = scmp.lt.s32.totalorder %s14, 2
      // Predicated region
      $region13: #{tpu_custom_call.1} parent=5 // pred_check
        %p137 = pneg %p136
      $region14: #{tpu_custom_call.1} parent=5 // pred_check_branch
        %139 = sbr.rel (%p137) target = $region16
      $region15: #{tpu_custom_call.1} parent=5 // pred_region
        // Predicated region
        $region17: #{tpu_custom_call.1} parent=15 // pred_check
          %p140 = pneg %p57
        $region18: #{tpu_custom_call.1} parent=15 // pred_check_branch
          %142 = sbr.rel (%p140) target = $region20
        $region19: #{tpu_custom_call.1} parent=15 // pred_region
          %s143 = sand.u32 %s47, 1
          %s144 = scalar_lea.sflag [#allocation4], %s143
          %s145 = sand.u32 %s47, 1
          %s146 = smul.addr %s145, 8
          %s147 = scalar_lea.vmem [#allocation3], %s146
          %s148 = sadd.s32 %s22, %s23
          %s149 = smul.u32 2, %s148
          %s151 = ssub.s32 128, 128
          %152 = vsyncadd %s144, %s151
          %s153 = smul.addr %s21, 2
          %s154 = sadd.s32 %s149, %s153
          %s155 = smul.addr %s154, 64
          %s156 = scalar_lea.hbm %s0, %s155
          %s158 = sshll.u32 %s147, 4
          %s159 = int_to_ptr.vmem [resolvable:$true] %s158
          %161 = dma.hbm_to_vmem [thread:$0]  %s156, 128, %s159, %s144
        $region20: #{tpu_custom_call.1} parent=15 // pred_fallthru
          _
        // Predicated region
        $region21: #{tpu_custom_call.1} parent=15 // pred_check
          %p162 = pneg %p87
        $region22: #{tpu_custom_call.1} parent=15 // pred_check_branch
          %164 = sbr.rel (%p162) target = $region24
        $region23: #{tpu_custom_call.1} parent=15 // pred_region
          %s165 = sand.u32 %s77, 1
          %s166 = scalar_lea.sflag [#allocation6], %s165
          %s167 = sand.u32 %s77, 1
          %s168 = smul.addr %s167, 8
          %s169 = scalar_lea.vmem [#allocation5], %s168
          %s170 = sadd.s32 %s22, %s23
          %s171 = smul.u32 2, %s170
          %s173 = ssub.s32 128, 128
          %174 = vsyncadd %s166, %s173
          %s175 = smul.addr %s21, 2
          %s176 = sadd.s32 %s171, %s175
          %s177 = smul.addr %s176, 64
          %s178 = scalar_lea.hbm %s1, %s177
          %s180 = sshll.u32 %s169, 4
          %s181 = int_to_ptr.vmem [resolvable:$true] %s180
          %183 = dma.hbm_to_vmem [thread:$0]  %s178, 128, %s181, %s166
        $region24: #{tpu_custom_call.1} parent=15 // pred_fallthru
          _
      $region16: #{tpu_custom_call.1} parent=5 // pred_fallthru
        _
      %p184 = scmp.le.s32.totalorder 1, %s14
      %p185 = scmp.lt.s32.totalorder %s14, 3
      %p186 = pnand %p184, %p185
      %p187 = pneg %p186
      // Predicated region
      $region25: #{tpu_custom_call.1} parent=5 // pred_check
        _
      $region26: #{tpu_custom_call.1} parent=5 // pred_check_branch
        %189 = sbr.rel (%p186) target = $region28
      $region27: #{tpu_custom_call.1} parent=5 // pred_region
        %s190 = ssub.s32 %s14, 1
        %s191 = sand.u32 %s50, 1
        %s192 = scalar_lea.sflag [#allocation4], %s191
        %s193 = sand.u32 %s50, 1
        %s194 = smul.addr %s193, 8
        %s195 = scalar_lea.vmem [#allocation3], %s194
        // Predicated region
        $region29: #{tpu_custom_call.1} parent=27 // pred_check
          %p196 = pneg %p63
        $region30: #{tpu_custom_call.1} parent=27 // pred_check_branch
          %198 = sbr.rel (%p196) target = $region32
        $region31: #{tpu_custom_call.1} parent=27 // pred_region
          %199 = dma.done %s192, 128
        $region32: #{tpu_custom_call.1} parent=27 // pred_fallthru
          _
        %s200 = sand.u32 %s80, 1
        %s201 = scalar_lea.sflag [#allocation6], %s200
        %s202 = sand.u32 %s80, 1
        %s203 = smul.addr %s202, 8
        %s204 = scalar_lea.vmem [#allocation5], %s203
        // Predicated region
        $region33: #{tpu_custom_call.1} parent=27 // pred_check
          %p205 = pneg %p93
        $region34: #{tpu_custom_call.1} parent=27 // pred_check_branch
          %207 = sbr.rel (%p205) target = $region36
        $region35: #{tpu_custom_call.1} parent=27 // pred_region
          %208 = dma.done %s201, 128
        $region36: #{tpu_custom_call.1} parent=27 // pred_fallthru
          _
        %s209 = sand.u32 %s50, 1
        %s210 = scalar_lea.sflag [#allocation4], %s209
        %s211 = sand.u32 %s50, 1
        %s212 = smul.addr %s211, 8
        %s213 = scalar_lea.vmem [#allocation3], %s212
        %p214 = pneg %p63
        %p215 = pneg %p60
        %s216 = sand.u32 %s80, 1
        %s217 = scalar_lea.sflag [#allocation6], %s216
        %s218 = sand.u32 %s80, 1
        %s219 = smul.addr %s218, 8
        %s220 = scalar_lea.vmem [#allocation5], %s219
        %p221 = pneg %p93
        %p222 = pneg %p90
        %p223 = pneg %p121
        %p224 = pneg %p118
        %p225 = scmp.lt.s32.totalorder %s24, 1
        %s226 = scalar_select %p225, %s24, 1
        %p227 = scmp.lt.s32.totalorder %s25, 0
        %s228 = scalar_select %p227, %s25, 0
        %s229 = sadd.s32 %s228, %s226
        %s230 = smul.addr %s229, 4
        %s231 = scalar_lea.vmem %s2, %s230
        %s232 = sadd.s32 %s25, %s26
        %s233 = smul.u32 2, %s232
        %s234 = sadd.s32 %s25, %s26
        %s235 = smul.u32 2, %s234
        %p236 = scmp.lt.s32.totalorder %s24, 1
        %s237 = scalar_select %p236, %s24, 1
        %p238 = scmp.lt.s32.totalorder %s25, 0
        %s239 = scalar_select %p238, %s25, 0
        %s240 = sadd.s32 %s239, %s237
        %s241 = smul.addr %s240, 4
        %s242 = scalar_lea.vmem %s2, %s241
        %p243 = scmp.eq.s32.totalorder %s26, 0
        // Predicated region
        $region37: #{tpu_custom_call.1} parent=27 // pred_check
          %p244 = pneg %p243
        $region38: #{tpu_custom_call.1} parent=27 // pred_check_branch
          %246 = sbr.rel (%p244) target = $region40
        $region39: #{tpu_custom_call.1} parent=27 // pred_region
          %vm247 = vcmask 11264
          %248 = vst.msk [vmem:[#allocation2] sm:$0xf] %vm247, 0.0
        $region40: #{tpu_custom_call.1} parent=27 // pred_fallthru
          _
        %v249 = vld [vmem:[%s195] sm:$0xff]
        %v250 = vld [vmem:[%s204] sm:$0xff]
        %v252 = vcombine.high %v249, %v249
        %vm254 = vcmask 1043456
        %v255 = vsel %vm254, %v249, -inf
        %v256 = vrot.slane %v255, 4
        %v257 = vmax.f32 %v255, %v256
        %v258 = vrot.slane %v257, 2
        %v259 = vmax.f32 %v257, %v258
        %v260 = vrot.slane %v259, 1
        %v261 = vmax.f32 %v259, %v260
        %v262 = vsel %vm254, %v252, -inf
        %v263 = vrot.slane %v262, 4
        %v264 = vmax.f32 %v262, %v263
        %v265 = vrot.slane %v264, 2
        %v266 = vmax.f32 %v264, %v265
        %v267 = vrot.slane %v266, 1
        %v268 = vmax.f32 %v266, %v267
        %v271 = vcombine.low %v261, %v268
        %v273 = vsub.f32 %v249, %v271
        %v274 = vmul.f32 %v273, 1.442695
        %v275 = vpow.pop %v274
        %v277 = vcombine.high %v275, %v275
        %v279 = vsel %vm254, %v275, 0.0
        %v280 = vrot.slane %v279, 4
        %v281 = vadd.f32 %v279, %v280
        %v282 = vrot.slane %v281, 2
        %v283 = vadd.f32 %v281, %v282
        %v284 = vrot.slane %v283, 1
        %v285 = vadd.f32 %v283, %v284
        %v286 = vsel %vm254, %v277, 0.0
        %v287 = vrot.slane %v286, 4
        %v288 = vadd.f32 %v286, %v287
        %v289 = vrot.slane %v288, 2
        %v290 = vadd.f32 %v288, %v289
        %v291 = vrot.slane %v290, 1
        %v292 = vadd.f32 %v290, %v291
        %v293 = vrcp.pop %v285
        %v294 = vrcp.pop %v292
        %v297 = vcombine.low %v293, %v294
        %v299 = vmul.f32 %v275, %v297
        %v300 = vmul.f32 %v299, %v250
        %v302 = vcombine.high %v300, %v300
        %v304 = vsel %vm254, %v300, 0.0
        %v305 = vsel %vm254, %v302, 0.0
        %v306 = vadd.f32 %v304, %v305
        %307 = vadd.xlane.f32.xlu0 %v306
        %v308 = vpop.xlane.xlu0 %307
        %v309 = vadd.f32 %v299, %v250
        %v311 = vcombine.high %v309, %v309
        %v313 = vsel %vm254, %v309, 0.0
        %v314 = vsel %vm254, %v311, 0.0
        %v315 = vadd.f32 %v313, %v314
        %316 = vadd.xlane.f32.xlu0 %v315
        %v317 = vpop.xlane.xlu0 %316
        %v318 = vld [vmem:[#allocation2] sm:$0xf]
        %vm319 = vcmask 7168
        %v320 = vsel %vm319, %v308, %v317
        %v321 = vadd.f32 %v318, %v320
        %vm322 = vcmask 11264
        %323 = vst.msk [vmem:[#allocation2] sm:$0xf] %vm322, %v321
        // Predicated region
        $region41: #{tpu_custom_call.1} parent=27 // pred_check
          %p324 = pneg %p243
        $region42: #{tpu_custom_call.1} parent=27 // pred_check_branch
          %326 = sbr.rel (%p324) target = $region44
        $region43: #{tpu_custom_call.1} parent=27 // pred_region
          %v327 = vld [vmem:[#allocation2] sm:$0xf]
          %328 = vst.msk [vmem:[%s242] sm:$0xf] %vm322, %v327
        $region44: #{tpu_custom_call.1} parent=27 // pred_fallthru
          _
        %p329 = scmp.lt.s32.totalorder %s24, 1
        %s330 = scalar_select %p329, %s24, 1
        %p331 = scmp.lt.s32.totalorder %s25, 0
        %s332 = scalar_select %p331, %s25, 0
        %s333 = sadd.s32 %s332, %s330
        %s334 = smul.addr %s333, 4
        %s335 = scalar_lea.vmem %s2, %s334
        // Predicated region
        $region45: #{tpu_custom_call.1} parent=27 // pred_check
          %p336 = pneg %p118
        $region46: #{tpu_custom_call.1} parent=27 // pred_check_branch
          %338 = sbr.rel (%p336) target = $region48
        $region47: #{tpu_custom_call.1} parent=27 // pred_region
          _
        $region48: #{tpu_custom_call.1} parent=27 // pred_fallthru
          _
      $region28: #{tpu_custom_call.1} parent=5 // pred_fallthru
        _
      %p339 = scmp.le.s32.totalorder 2, %s14
      // Predicated region
      $region49: #{tpu_custom_call.1} parent=5 // pred_check
        %p340 = pneg %p339
      $region50: #{tpu_custom_call.1} parent=5 // pred_check_branch
        %342 = sbr.rel (%p340) target = $region52
      $region51: #{tpu_custom_call.1} parent=5 // pred_region
        %s343 = ssub.s32 %s14, 2
        // Predicated region
        $region53: #{tpu_custom_call.1} parent=51 // pred_check
          %p344 = pneg %p124
        $region54: #{tpu_custom_call.1} parent=51 // pred_check_branch
          %346 = sbr.rel (%p344) target = $region56
        $region55: #{tpu_custom_call.1} parent=51 // pred_region
          %p347 = scmp.lt.s32.totalorder %s27, 1
          %s348 = scalar_select %p347, %s27, 1
          %p349 = scmp.lt.s32.totalorder %s28, 0
          %s350 = scalar_select %p349, %s28, 0
          %s351 = sadd.s32 %s350, %s348
          %s352 = smul.addr %s351, 4
          %s353 = scalar_lea.vmem %s2, %s352
        $region56: #{tpu_custom_call.1} parent=51 // pred_fallthru
          _
      $region52: #{tpu_custom_call.1} parent=5 // pred_fallthru
        _
    $region6: #{tpu_custom_call.1} parent=1 // loop_footer
      %s18 = sadd.s32 1, %s14
    $region7: #{tpu_custom_call.1} parent=1 // loop_footer_branch
      %13 = sbr.rel target = $region3
    $region8: #{tpu_custom_call.1} parent=1 // loop_exit
      _
    %354 = vsyncpa [#allocation4], 1
    %s355 = scalar_lea.sflag [#allocation4], 1
    %356 = vsyncpa %s355, 1
    %357 = vsyncpa [#allocation6], 1
    %s358 = scalar_lea.sflag [#allocation6], 1
    %359 = vsyncpa %s358, 1

</llo_original>
